<compile_context>
chip_gen: v5e
topology: v5e:2x2
jax: 0.10.0
libtpu: 0.0.40
codegen_flags: <defaults>
</compile_context>

<pallas_src>
import math

import jax
import jax.numpy as jnp
from jax.experimental import pallas as pl
from jax.experimental.pallas import tpu as pltpu


def _rprelu_kernel(x_ref, p_ref, o_ref):
    x = x_ref[...]                     # (block_rows, W)
    m1 = p_ref[0:1, :]                 # (1, W) broadcast over rows
    alpha = p_ref[1:2, :]              # (1, W)
    m2 = p_ref[2:3, :]                 # (1, W)
    y = x - m1
    o_ref[...] = (jnp.where(y > 0, y, alpha * y) + m2).astype(o_ref.dtype)


def _round_up(n, m):
    return ((n + m - 1) // m) * m


def rprelu(x, move1, prelu_weight, move2, *, target_block_bytes=2 * 1024 * 1024):
    """x: (..., H); move1 / prelu_weight / move2: (H,)."""
    orig_shape = x.shape
    H = orig_shape[-1]
    dtype = x.dtype
    itemsize = jnp.dtype(dtype).itemsize

    x2d = x.reshape(-1, H)
    rows = x2d.shape[0]

    # Sub-32-bit dtypes pack rows along sublanes: align the row tile so stores
    # stay fully unmasked (8 rows for f32, 16 for bf16, 32 for int8/fp8).
    align = max(8, 32 // itemsize)

    # ---- lane folding: only when it is free (no padding, bounded width) ----
    fold = 1
    if H % 128 != 0:
        cand = math.lcm(H, 128) // H
        if cand <= 128 and cand * H <= 4096 and rows % cand == 0:
            fold = cand
    W = fold * H
    folded_rows = rows // fold

    # Per-channel params, tiled across folded lanes, packed into one operand.
    params = jnp.stack(
        [
            jnp.tile(move1.astype(dtype), fold),
            jnp.tile(prelu_weight.astype(dtype), fold),
            jnp.tile(move2.astype(dtype), fold),
        ],
        axis=0,
    )  # (3, W), resident in VMEM (constant index_map)

    # ---- row tile from the byte budget, sublane-aligned, >= ~4 grid steps --
    bytes_per_frow = W * itemsize
    block_rows = max(align, int(target_block_bytes // bytes_per_frow))
    block_rows = (block_rows // align) * align
    block_rows = min(block_rows,
                     max(align, _round_up(pl.cdiv(folded_rows, 4), align)))
    if block_rows >= folded_rows:
        block_rows = folded_rows           # single full-extent block (legal)
    grid = pl.cdiv(folded_rows, block_rows)

    xf = x2d.reshape(folded_rows, W)       # exact reshape; no padding copy

    out = pl.pallas_call(
        _rprelu_kernel,
        out_shape=jax.ShapeDtypeStruct((folded_rows, W), dtype),
        grid_spec=pltpu.PrefetchScalarGridSpec(
            num_scalar_prefetch=0,
            grid=(grid,),
            in_specs=[
                pl.BlockSpec((block_rows, W), lambda i: (i, 0)),
                pl.BlockSpec((3, W), lambda i: (0, 0)),
            ],
            out_specs=pl.BlockSpec((block_rows, W), lambda i: (i, 0)),
        ),
        # TODO(synk): on v7x, switch this axis to pltpu.CORE_PARALLEL if plain
        # "parallel" is not sharded across the two TensorCores.
        compiler_params=pltpu.CompilerParams(
            dimension_semantics=("parallel",),
        ),
    )(xf, params)

    return out.reshape(rows, H).reshape(orig_shape)


def rprelu_ref(x, move1, prelu_weight, move2):
    y = x - move1
    return jnp.where(y > 0, y, prelu_weight * y) + move2


if __name__ == "__main__":
    key = jax.random.PRNGKey(0)
    kx, k1, k2, k3 = jax.random.split(key, 4)

    # ---- case 1: small ViT-like shape, folding fast path (H=32, fold=4) ----
    B, N, H = 2, 8, 32
    x = jax.random.normal(kx, (B, N, H), dtype=jnp.float32)
    move1 = 0.1 * jax.random.normal(k1, (H,), dtype=jnp.float32)
    prelu_w = jnp.full((H,), 0.25, dtype=jnp.float32) + 0.05 * jax.random.normal(
        k2, (H,), dtype=jnp.float32)
    move2 = 0.1 * jax.random.normal(k3, (H,), dtype=jnp.float32)

    out = jax.block_until_ready(rprelu(x, move1, prelu_w, move2))
    ref = rprelu_ref(x, move1, prelu_w, move2)
    assert out.shape == x.shape
    assert jnp.allclose(out, ref, atol=1e-6, rtol=1e-6), "f32 mismatch vs reference"

    # ---- case 2: bf16, lane-dense H, ragged row tail (no padding path) -----
    B2, N2, H2 = 3, 7, 256
    x2 = jax.random.normal(kx, (B2, N2, H2), dtype=jnp.bfloat16)
    m1b = 0.1 * jax.random.normal(k1, (H2,), dtype=jnp.float32)
    alb = jnp.full((H2,), 0.25, dtype=jnp.float32)
    m2b = 0.1 * jax.random.normal(k3, (H2,), dtype=jnp.float32)
    out2 = jax.block_until_ready(rprelu(x2, m1b, alb, m2b))
    ref2 = rprelu_ref(x2, m1b.astype(jnp.bfloat16), alb.astype(jnp.bfloat16),
                      m2b.astype(jnp.bfloat16))
    assert out2.shape == x2.shape
    assert jnp.allclose(out2.astype(jnp.float32), ref2.astype(jnp.float32),
                        atol=2e-2, rtol=2e-2), "bf16 mismatch vs reference"

    # ---- case 3: rows not divisible by fold -> fold=1 fallback, full-H lane -
    B3, N3, H3 = 5, 3, 96
    x3 = jax.random.normal(kx, (B3, N3, H3), dtype=jnp.float32)
    m1c = 0.1 * jax.random.normal(k1, (H3,), dtype=jnp.float32)
    alc = jnp.full((H3,), 0.25, dtype=jnp.float32) + 0.05 * jax.random.normal(
        k2, (H3,), dtype=jnp.float32)
    m2c = 0.1 * jax.random.normal(k3, (H3,), dtype=jnp.float32)
    out3 = jax.block_until_ready(rprelu(x3, m1c, alc, m2c))
    ref3 = rprelu_ref(x3, m1c, alc, m2c)
    assert out3.shape == x3.shape
    assert jnp.allclose(out3, ref3, atol=1e-6, rtol=1e-6), "fallback mismatch vs reference"

    print("KERNEL_OK")
</pallas_src>

<mosaic_0001>
module attributes {stable_mosaic.version = 11 : i64} {
  func.func @_rprelu_kernel(%arg0: i32, %arg1: memref<4x128xf32, #tpu.memory_space<vmem>>, %arg2: memref<3x128xf32, #tpu.memory_space<vmem>>, %arg3: memref<4x128xf32, #tpu.memory_space<vmem>>) attributes {dimension_semantics = [#tpu.dimension_semantics<parallel>], iteration_bounds = array<i64: 1>, scalar_prefetch = 0 : i64, scratch_operands = 0 : i64, tpu.core_type = #tpu.core_type<tc>, window_params = [{transform_indices = @transform_0, window_bounds = array<i64: 4, 128>}, {pipeline_mode = #tpu.pipeline_mode<synchronous>, transform_indices = @transform_1, window_bounds = array<i64: 3, 128>}, {transform_indices = @transform_2, window_bounds = array<i64: 4, 128>}]} {
    %c0 = arith.constant 0 : index
    %c0_0 = arith.constant 0 : index
    %0 = vector.load %arg1[%c0, %c0_0] : memref<4x128xf32, #tpu.memory_space<vmem>>, vector<4x128xf32>
    %c0_1 = arith.constant 0 : index
    %c0_2 = arith.constant 0 : index
    %1 = vector.load %arg2[%c0_1, %c0_2] : memref<3x128xf32, #tpu.memory_space<vmem>>, vector<1x128xf32>
    %c1 = arith.constant 1 : index
    %c0_3 = arith.constant 0 : index
    %2 = vector.load %arg2[%c1, %c0_3] : memref<3x128xf32, #tpu.memory_space<vmem>>, vector<1x128xf32>
    %c2 = arith.constant 2 : index
    %c0_4 = arith.constant 0 : index
    %3 = vector.load %arg2[%c2, %c0_4] : memref<3x128xf32, #tpu.memory_space<vmem>>, vector<1x128xf32>
    %4 = vector.broadcast %1 : vector<1x128xf32> to vector<4x128xf32>
    %5 = arith.subf %0, %4 : vector<4x128xf32>
    %cst = arith.constant 0.000000e+00 : f32
    %6 = vector.broadcast %cst : f32 to vector<4x128xf32>
    %7 = arith.cmpf ogt, %5, %6 : vector<4x128xf32>
    %8 = vector.broadcast %2 : vector<1x128xf32> to vector<4x128xf32>
    %9 = arith.mulf %8, %5 : vector<4x128xf32>
    %10 = arith.select %7, %5, %9 : vector<4x128xi1>, vector<4x128xf32>
    %11 = vector.broadcast %3 : vector<1x128xf32> to vector<4x128xf32>
    %12 = arith.addf %10, %11 : vector<4x128xf32>
    %c0_5 = arith.constant 0 : index
    %c0_6 = arith.constant 0 : index
    %13 = vector.load %arg3[%c0_5, %c0_6] : memref<4x128xf32, #tpu.memory_space<vmem>>, vector<4x128xf32>
    tpu.vector_store %arg3[%c0_5, %c0_6], %12 {strides = array<i32>} : memref<4x128xf32, #tpu.memory_space<vmem>>, vector<4x128xf32>,
    return
  }
  func.func @transform_0(%arg0: i32) -> (i32, i32) {
    %c0_i32 = arith.constant 0 : i32
    %c0_i32_0 = arith.constant 0 : i32
    return %arg0, %c0_i32 : i32, i32
  }
  func.func @transform_1(%arg0: i32) -> (i32, i32) {
    %c0_i32 = arith.constant 0 : i32
    %c0_i32_0 = arith.constant 0 : i32
    %c0_i32_1 = arith.constant 0 : i32
    return %c0_i32, %c0_i32_0 : i32, i32
  }
  func.func @transform_2(%arg0: i32) -> (i32, i32) {
    %c0_i32 = arith.constant 0 : i32
    %c0_i32_0 = arith.constant 0 : i32
    return %arg0, %c0_i32 : i32, i32
  }
}

</mosaic_0001>

<llo_original>
// kernel: tpu_custom_call.1
$region0: #{tpu_custom_call.1}
  #allocation0 [shape = 'u32[]', space=smem, size = 0x4, offset = 0x4, fixed_abs, tag = 'smem constant byte address 0x4 - core index']
  #allocation1 [shape = 'u32[72,128]{1,0:T(1,128)}', space=vmem, size = 0x9000, scoped, tag = 'internal scratch']
  %s0 = inlined_call_operand.hbm [shape: f32[4,128], index: 0, kind: input, shape index: {}]
  %s1 = inlined_call_operand.hbm [shape: f32[3,128], index: 1, kind: input, shape index: {}]
  %s2 = inlined_call_operand.hbm [shape: f32[4,128], index: 2, kind: output, shape index: {}]
  %s3 = sld [smem:[#allocation0]]
  $region26: #{tpu_custom_call.1} parent=0
    _
  %s5 = ssub.s32 1, %s3
  %s6 = scalar_select 0, %s5, %s3
  $region1: #{tpu_custom_call.1} parent=0
    #allocation2 [shape = 'u8[2048]{0}', space=vmem, size = 0x800, scoped, tag = 'input window, operand 0, single buffered']
    #allocation3 [shape = 's32[1]{0}', space=sflag, size = 0x4, scoped, tag = 'scoped memory for tpu_custom_call.1']
    #allocation4 [shape = 's32[1]{0}', space=sflag, size = 0x4, scoped, tag = 'scoped memory for tpu_custom_call.1']
    #allocation5 [shape = 'u8[2048]{0}', space=vmem, size = 0x800, scoped, tag = 'input window, operand 1, single buffered']
    #allocation6 [shape = 's32[1]{0}', space=sflag, size = 0x4, scoped, tag = 'scoped memory for tpu_custom_call.1']
    #allocation7 [shape = 'u8[2048]{0}', space=vmem, size = 0x800, scoped, tag = 'output window, operand 0, single buffered']
    %7 = vsyncpa [#allocation3], 0
    %8 = vsyncpa [#allocation6], 0
    %9 = vsyncpa [#allocation4], 0
    // Predicated region
    $region2: #{tpu_custom_call.1} parent=1 // pred_check
      _
    $region3: #{tpu_custom_call.1} parent=1 // pred_check_branch
      %11 = sbr.rel (0) target = $region5
    $region4: #{tpu_custom_call.1} parent=1 // pred_region
      %13 = vsyncadd [#allocation3], 0
      %s15 = sshll.u32 %s0, 4
      %s16 = int_to_ptr.hbm [resolvable:$true] %s15
      %s17 = sshll.u32 [#allocation2], 4
      %s18 = int_to_ptr.vmem [resolvable:$true] %s17
      %20 = dma.hbm_to_vmem [thread:$0]  %s16, 64, %s18, [#allocation3]
    $region5: #{tpu_custom_call.1} parent=1 // pred_fallthru
      _
    // Predicated region
    $region6: #{tpu_custom_call.1} parent=1 // pred_check
      _
    $region7: #{tpu_custom_call.1} parent=1 // pred_check_branch
      %22 = sbr.rel (0) target = $region9
    $region8: #{tpu_custom_call.1} parent=1 // pred_region
      %24 = vsyncadd [#allocation6], 0
      %s26 = sshll.u32 %s1, 4
      %s27 = int_to_ptr.hbm [resolvable:$true] %s26
      %s28 = sshll.u32 [#allocation5], 4
      %s29 = int_to_ptr.vmem [resolvable:$true] %s28
      %31 = dma.hbm_to_vmem [thread:$0]  %s27, 64, %s29, [#allocation6]
    $region9: #{tpu_custom_call.1} parent=1 // pred_fallthru
      _
    // Predicated region
    $region10: #{tpu_custom_call.1} parent=1 // pred_check
      _
    $region11: #{tpu_custom_call.1} parent=1 // pred_check_branch
      %33 = sbr.rel (0) target = $region13
    $region12: #{tpu_custom_call.1} parent=1 // pred_region
      %35 = dma.done [#allocation3], 64
    $region13: #{tpu_custom_call.1} parent=1 // pred_fallthru
      _
    // Predicated region
    $region14: #{tpu_custom_call.1} parent=1 // pred_check
      _
    $region15: #{tpu_custom_call.1} parent=1 // pred_check_branch
      %37 = sbr.rel (0) target = $region17
    $region16: #{tpu_custom_call.1} parent=1 // pred_region
      %39 = dma.done [#allocation6], 64
    $region17: #{tpu_custom_call.1} parent=1 // pred_fallthru
      _
    %v40 = vld [vmem:[#allocation2] sm:$0xf]
    %v41 = vld [vmem:[#allocation5] sm:$0x1]
    %v42 = vld [vmem:[#allocation5 + $0x1] sm:$0x1]
    %v43 = vld [vmem:[#allocation5 + $0x2] sm:$0x1]
    %v44 = vperm.slane %v41, 0
    %v45 = vsub.f32 %v40, %v44
    %vm46 = vcmp.gt.f32.partialorder %v45, 0.0
    %v47 = vperm.slane %v42, 0
    %v48 = vmul.f32 %v47, %v45
    %v49 = vsel %vm46, %v45, %v48
    %v50 = vperm.slane %v43, 0
    %v51 = vadd.f32 %v49, %v50
    %52 = vst [vmem:[#allocation7] sm:$0xf] %v51
    // Predicated region
    $region18: #{tpu_custom_call.1} parent=1 // pred_check
      _
    $region19: #{tpu_custom_call.1} parent=1 // pred_check_branch
      %54 = sbr.rel (0) target = $region21
    $region20: #{tpu_custom_call.1} parent=1 // pred_region
      %56 = vsyncadd [#allocation4], 0
      %s58 = sshll.u32 [#allocation7], 4
      %s59 = int_to_ptr.vmem [resolvable:$true] %s58
      %s60 = sshll.u32 %s2, 4
      %s61 = int_to_ptr.hbm [resolvable:$true] %s60
      %63 = dma.vmem_to_hbm [thread:$0]  %s59, 64, %s61, [#allocation4]
    $region21: #{tpu_custom_call.1} parent=1 // pred_fallthru
      _
    // Predicated region
    $region22: #{tpu_custom_call.1} parent=1 // pred_check
      _
    $region23: #{tpu_custom_call.1} parent=1 // pred_check_branch
      %65 = sbr.rel (0) target = $region25
    $region24: #{tpu_custom_call.1} parent=1 // pred_region
      %67 = dma.done [#allocation4], 64
    $region25: #{tpu_custom_call.1} parent=1 // pred_fallthru
      _
    %68 = vsyncpa [#allocation3], 1
    %69 = vsyncpa [#allocation6], 1
    %70 = vsyncpa [#allocation4], 1

</llo_original>
